<compile_context>
chip_gen: v7x
topology: tpu7x:2x2x1
jax: 0.10.0
libtpu: 0.0.40
codegen_flags: <defaults>
</compile_context>

<pallas_src>
import jax
import jax.numpy as jnp
from jax.experimental import pallas as pl
from jax.experimental.pallas import tpu as pltpu


# ----------------------------- Pallas kernel --------------------------------
def policy_kernel(x_ref, w1_ref, b1_ref, w2_ref, b2_ref, w3_ref, b3_ref,
                  mean_ref):
    # Batch-on-lanes layout: every operand has batch as the minor (lane) axis.
    x = x_ref[...]                                               # (S, TB) bf16

    # bf16 MXU inputs, f32 accumulation; bias-add / tanh in f32 (v5e-safe).
    h1 = jnp.tanh(
        jnp.dot(w1_ref[...], x, preferred_element_type=jnp.float32)
        + b1_ref[...])                                           # (30, TB) f32

    h2 = jnp.tanh(
        jnp.dot(w2_ref[...], h1.astype(jnp.bfloat16),
                preferred_element_type=jnp.float32)
        + b2_ref[...])                                           # (30, TB) f32

    mean = jnp.tanh(
        jnp.dot(w3_ref[...], h2.astype(jnp.bfloat16),
                preferred_element_type=jnp.float32)
        + b3_ref[...])                                           # (A, TB) f32

    mean_ref[...] = mean.astype(mean_ref.dtype)


# ------------------------------ wrapper --------------------------------------
def _round_up(x, m):
    return ((x + m - 1) // m) * m


def _choose_batch_tiling(batch, block_b):
    """Pick (tile, padded_batch).

    The tile is a multiple of 128 (lane width, batch lives on lanes), padding
    waste is minimized (even split of the padded batch instead of a fixed cap),
    and when everything fits in a single tile that can be split evenly we use
    two tiles so the 'parallel' axis shards across both v7x TensorCores.
    """
    padded_min = _round_up(max(batch, 1), 128)
    n_tiles = max(1, pl.cdiv(padded_min, max(block_b, 128)))
    if n_tiles == 1 and padded_min % 256 == 0:
        n_tiles = 2                      # megacore hint: costs ~0.35us, uses 2 TCs
    tb = _round_up(pl.cdiv(padded_min, n_tiles), 128)
    return tb, tb * n_tiles


def policy_forward(state, params, *, block_b=4096):
    """state: (B, state_size) f32.

    Returns (mean (B, A), scale (A,)) -- the parameters of the Normal
    distribution the PyTorch module builds (`Normal(mean, softplus(std))`).
    `scale` is state-independent, so it is returned un-broadcast; callers
    broadcast lazily.
    """
    w1, b1, w2, b2, w3, b3, std = params
    B, S = state.shape
    A = w3.shape[0]

    # softplus(std) is state-independent: plain JAX, no (B, A) materialization.
    scale = jax.nn.softplus(std)                                 # (A,)

    tb, padded_b = _choose_batch_tiling(B, block_b)
    grid = (padded_b // tb,)

    # Batch-on-lanes layout: x^T is (S, padded_B) in bf16 (halves the HBM
    # stream; MXU is bf16-native, accumulation stays f32 in-kernel).
    x_t = jnp.pad(state.T.astype(jnp.bfloat16), ((0, 0), (0, padded_b - B)))

    w1b = w1.astype(jnp.bfloat16)
    w2b = w2.astype(jnp.bfloat16)
    w3b = w3.astype(jnp.bfloat16)

    # Weights/biases: constant index_map -> VMEM-resident across the grid.
    resident = lambda arr: pl.BlockSpec(arr.shape, lambda i: (0,) * arr.ndim)

    mean_t = pl.pallas_call(
        policy_kernel,
        out_shape=jax.ShapeDtypeStruct((A, padded_b), jnp.float32),
        grid=grid,
        in_specs=[
            pl.BlockSpec((S, tb), lambda i: (0, i)),   # state^T, tiled on lanes
            resident(w1b), resident(b1),
            resident(w2b), resident(b2),
            resident(w3b), resident(b3),
        ],
        out_specs=pl.BlockSpec((A, tb), lambda i: (0, i)),
        compiler_params=pltpu.CompilerParams(
            dimension_semantics=("parallel",)),        # shard batch over TCs
    )(x_t, w1b, b1, w2b, b2, w3b, b3)

    mean = mean_t[:, :B].T                             # back to (B, A)
    return mean, scale


# -------------------------- deterministic init --------------------------------
def orthogonal(key, rows, cols, scale=1.0):
    """Deterministic orthogonal init (matches nn.init.orthogonal_ semantics)."""
    n = max(rows, cols)
    a = jax.random.normal(key, (n, n), dtype=jnp.float32)
    q, r = jnp.linalg.qr(a)
    q = q * jnp.sign(jnp.diag(r))          # make the decomposition unique
    return (q[:rows, :cols] * scale).astype(jnp.float32)


def init_policy_params(key, state_size, action_size, hidden=30):
    k1, k2, k3 = jax.random.split(key, 3)
    # weights stored in PyTorch nn.Linear (out_features, in_features) order
    w1 = orthogonal(k1, hidden, state_size, 1.0)
    w2 = orthogonal(k2, hidden, hidden, 1.0)
    w3 = orthogonal(k3, action_size, hidden, 0.001)
    # biases stored as (out, 1) columns for the batch-on-lanes layout
    b1 = jnp.zeros((hidden, 1), jnp.float32)
    b2 = jnp.zeros((hidden, 1), jnp.float32)
    b3 = jnp.zeros((action_size, 1), jnp.float32)
    std = jnp.zeros((action_size,), jnp.float32)   # nn.Parameter(torch.zeros(A))
    return (w1, b1, w2, b2, w3, b3, std)


def _reference(state, params):
    """Pure-JAX f32 reference of the PyTorch forward."""
    w1, b1, w2, b2, w3, b3, std = params
    h = jnp.tanh(state @ w1.T + b1[:, 0])
    h = jnp.tanh(h @ w2.T + b2[:, 0])
    mean = jnp.tanh(h @ w3.T + b3[:, 0])
    scale = jax.nn.softplus(std)
    return mean, scale


# --------------------------------- main ---------------------------------------
if __name__ == "__main__":
    state_size = 16
    action_size = 4

    key = jax.random.PRNGKey(0)
    k_params, k_state1, k_state2, k_b = jax.random.split(key, 4)
    params = init_policy_params(k_params, state_size, action_size)

    # --- small batch: single tile, spec-faithful zero biases / zero std ---
    state = jax.random.normal(k_state1, (8, state_size), dtype=jnp.float32)
    mean, scale = policy_forward(state, params)
    jax.block_until_ready((mean, scale))

    ref_mean, ref_scale = _reference(state, params)
    assert mean.shape == (8, action_size)
    assert scale.shape == (action_size,)
    # bf16 matmul inputs, f32 accumulate -> small tolerance vs f32 reference.
    assert jnp.allclose(mean, ref_mean, atol=1e-2)
    assert jnp.allclose(scale, ref_scale, atol=1e-6)

    # --- multi-tile grid with batch padding, non-zero biases / std ---
    kb1, kb2, kb3, ks = jax.random.split(k_b, 4)
    w1, b1, w2, b2, w3, b3, std = params
    params2 = (w1, 0.1 * jax.random.normal(kb1, b1.shape, jnp.float32),
               w2, 0.1 * jax.random.normal(kb2, b2.shape, jnp.float32),
               w3, 0.1 * jax.random.normal(kb3, b3.shape, jnp.float32),
               0.1 * jax.random.normal(ks, std.shape, jnp.float32))
    state2 = jax.random.normal(k_state2, (300, state_size), dtype=jnp.float32)
    mean2, scale2 = policy_forward(state2, params2, block_b=128)   # grid=(3,)
    jax.block_until_ready((mean2, scale2))

    ref_mean2, ref_scale2 = _reference(state2, params2)
    assert mean2.shape == (300, action_size)
    assert scale2.shape == (action_size,)
    assert jnp.allclose(mean2, ref_mean2, atol=1e-2)
    assert jnp.allclose(scale2, ref_scale2, atol=1e-6)

    print("KERNEL_OK")
</pallas_src>

<mosaic_0001>
module attributes {stable_mosaic.version = 11 : i64} {
  func.func @policy_kernel(%arg0: i32, %arg1: memref<16x128xbf16, #tpu.memory_space<vmem>>, %arg2: memref<30x16xbf16, #tpu.memory_space<vmem>>, %arg3: memref<30x1xf32, #tpu.memory_space<vmem>>, %arg4: memref<30x30xbf16, #tpu.memory_space<vmem>>, %arg5: memref<30x1xf32, #tpu.memory_space<vmem>>, %arg6: memref<4x30xbf16, #tpu.memory_space<vmem>>, %arg7: memref<4x1xf32, #tpu.memory_space<vmem>>, %arg8: memref<4x128xf32, #tpu.memory_space<vmem>>) attributes {dimension_semantics = [#tpu.dimension_semantics<parallel>], iteration_bounds = array<i64: 1>, scalar_prefetch = 0 : i64, scratch_operands = 0 : i64, tpu.core_type = #tpu.core_type<tc>, window_params = [{transform_indices = @transform_0, window_bounds = array<i64: 16, 128>}, {pipeline_mode = #tpu.pipeline_mode<synchronous>, transform_indices = @transform_1, window_bounds = array<i64: 30, 16>}, {pipeline_mode = #tpu.pipeline_mode<synchronous>, transform_indices = @transform_2, window_bounds = array<i64: 30, 1>}, {pipeline_mode = #tpu.pipeline_mode<synchronous>, transform_indices = @transform_3, window_bounds = array<i64: 30, 30>}, {pipeline_mode = #tpu.pipeline_mode<synchronous>, transform_indices = @transform_4, window_bounds = array<i64: 30, 1>}, {pipeline_mode = #tpu.pipeline_mode<synchronous>, transform_indices = @transform_5, window_bounds = array<i64: 4, 30>}, {pipeline_mode = #tpu.pipeline_mode<synchronous>, transform_indices = @transform_6, window_bounds = array<i64: 4, 1>}, {transform_indices = @transform_7, window_bounds = array<i64: 4, 128>}]} {
    %c0 = arith.constant 0 : index
    %c0_0 = arith.constant 0 : index
    %0 = vector.load %arg1[%c0, %c0_0] : memref<16x128xbf16, #tpu.memory_space<vmem>>, vector<16x128xbf16>
    %c0_1 = arith.constant 0 : index
    %c0_2 = arith.constant 0 : index
    %1 = vector.load %arg2[%c0_1, %c0_2] : memref<30x16xbf16, #tpu.memory_space<vmem>>, vector<30x16xbf16>
    %cst = arith.constant dense<0.000000e+00> : vector<30x128xf32>
    %2 = tpu.matmul %1, %0, %cst {dimension_numbers = #tpu.dot_dimension_numbers<[1], [0], [0], [1], [0, 0, 1, 1], [], []>} : vector<30x16xbf16>, vector<16x128xbf16>, vector<30x128xf32> -> vector<30x128xf32>
    %c0_3 = arith.constant 0 : index
    %c0_4 = arith.constant 0 : index
    %3 = vector.load %arg3[%c0_3, %c0_4] : memref<30x1xf32, #tpu.memory_space<vmem>>, vector<30x1xf32>
    %4 = vector.broadcast %3 : vector<30x1xf32> to vector<30x128xf32>
    %5 = arith.addf %2, %4 : vector<30x128xf32>
    %6 = math.tanh %5 : vector<30x128xf32>
    %c0_5 = arith.constant 0 : index
    %c0_6 = arith.constant 0 : index
    %7 = vector.load %arg4[%c0_5, %c0_6] : memref<30x30xbf16, #tpu.memory_space<vmem>>, vector<30x30xbf16>
    %8 = arith.truncf %6 : vector<30x128xf32> to vector<30x128xbf16>
    %cst_7 = arith.constant dense<0.000000e+00> : vector<30x128xf32>
    %9 = tpu.matmul %7, %8, %cst_7 {dimension_numbers = #tpu.dot_dimension_numbers<[1], [0], [0], [1], [0, 0, 1, 1], [], []>} : vector<30x30xbf16>, vector<30x128xbf16>, vector<30x128xf32> -> vector<30x128xf32>
    %c0_8 = arith.constant 0 : index
    %c0_9 = arith.constant 0 : index
    %10 = vector.load %arg5[%c0_8, %c0_9] : memref<30x1xf32, #tpu.memory_space<vmem>>, vector<30x1xf32>
    %11 = vector.broadcast %10 : vector<30x1xf32> to vector<30x128xf32>
    %12 = arith.addf %9, %11 : vector<30x128xf32>
    %13 = math.tanh %12 : vector<30x128xf32>
    %c0_10 = arith.constant 0 : index
    %c0_11 = arith.constant 0 : index
    %14 = vector.load %arg6[%c0_10, %c0_11] : memref<4x30xbf16, #tpu.memory_space<vmem>>, vector<4x30xbf16>
    %15 = arith.truncf %13 : vector<30x128xf32> to vector<30x128xbf16>
    %cst_12 = arith.constant dense<0.000000e+00> : vector<4x128xf32>
    %16 = tpu.matmul %14, %15, %cst_12 {dimension_numbers = #tpu.dot_dimension_numbers<[1], [0], [0], [1], [0, 0, 1, 1], [], []>} : vector<4x30xbf16>, vector<30x128xbf16>, vector<4x128xf32> -> vector<4x128xf32>
    %c0_13 = arith.constant 0 : index
    %c0_14 = arith.constant 0 : index
    %17 = vector.load %arg7[%c0_13, %c0_14] : memref<4x1xf32, #tpu.memory_space<vmem>>, vector<4x1xf32>
    %18 = vector.broadcast %17 : vector<4x1xf32> to vector<4x128xf32>
    %19 = arith.addf %16, %18 : vector<4x128xf32>
    %20 = math.tanh %19 : vector<4x128xf32>
    %c0_15 = arith.constant 0 : index
    %c0_16 = arith.constant 0 : index
    %21 = vector.load %arg8[%c0_15, %c0_16] : memref<4x128xf32, #tpu.memory_space<vmem>>, vector<4x128xf32>
    tpu.vector_store %arg8[%c0_15, %c0_16], %20 {strides = array<i32>} : memref<4x128xf32, #tpu.memory_space<vmem>>, vector<4x128xf32>,
    return
  }
  func.func @transform_0(%arg0: i32) -> (i32, i32) {
    %c0_i32 = arith.constant 0 : i32
    %c0_i32_0 = arith.constant 0 : i32
    return %c0_i32, %arg0 : i32, i32
  }
  func.func @transform_1(%arg0: i32) -> (i32, i32) {
    %c0_i32 = arith.constant 0 : i32
    %c0_i32_0 = arith.constant 0 : i32
    %c0_i32_1 = arith.constant 0 : i32
    return %c0_i32, %c0_i32_0 : i32, i32
  }
  func.func @transform_2(%arg0: i32) -> (i32, i32) {
    %c0_i32 = arith.constant 0 : i32
    %c0_i32_0 = arith.constant 0 : i32
    %c0_i32_1 = arith.constant 0 : i32
    return %c0_i32, %c0_i32_0 : i32, i32
  }
  func.func @transform_3(%arg0: i32) -> (i32, i32) {
    %c0_i32 = arith.constant 0 : i32
    %c0_i32_0 = arith.constant 0 : i32
    %c0_i32_1 = arith.constant 0 : i32
    return %c0_i32, %c0_i32_0 : i32, i32
  }
  func.func @transform_4(%arg0: i32) -> (i32, i32) {
    %c0_i32 = arith.constant 0 : i32
    %c0_i32_0 = arith.constant 0 : i32
    %c0_i32_1 = arith.constant 0 : i32
    return %c0_i32, %c0_i32_0 : i32, i32
  }
  func.func @transform_5(%arg0: i32) -> (i32, i32) {
    %c0_i32 = arith.constant 0 : i32
    %c0_i32_0 = arith.constant 0 : i32
    %c0_i32_1 = arith.constant 0 : i32
    return %c0_i32, %c0_i32_0 : i32, i32
  }
  func.func @transform_6(%arg0: i32) -> (i32, i32) {
    %c0_i32 = arith.constant 0 : i32
    %c0_i32_0 = arith.constant 0 : i32
    %c0_i32_1 = arith.constant 0 : i32
    return %c0_i32, %c0_i32_0 : i32, i32
  }
  func.func @transform_7(%arg0: i32) -> (i32, i32) {
    %c0_i32 = arith.constant 0 : i32
    %c0_i32_0 = arith.constant 0 : i32
    return %c0_i32, %arg0 : i32, i32
  }
}

</mosaic_0001>

<llo_original>
// kernel: tpu_custom_call.1
$region0: #{tpu_custom_call.1}
  #allocation0 [shape = 'u32[]', space=smem, size = 0x4, offset = 0x4, fixed_abs, tag = 'smem constant byte address 0x4 - core index']
  #allocation1 [shape = 'u32[144,128]{1,0:T(1,128)}', space=vmem, size = 0x12000, scoped, tag = 'internal scratch']
  %s0 = inlined_call_operand.vmem [shape: bf16[16,128], index: 0, kind: input, shape index: {}]
  %s1 = inlined_call_operand.vmem [shape: bf16[30,16], index: 1, kind: input, shape index: {}]
  %s2 = inlined_call_operand.vmem [shape: f32[30,1], index: 2, kind: input, shape index: {}]
  %s3 = inlined_call_operand.vmem [shape: bf16[30,30], index: 3, kind: input, shape index: {}]
  %s4 = inlined_call_operand.vmem [shape: f32[30,1], index: 4, kind: input, shape index: {}]
  %s5 = inlined_call_operand.vmem [shape: bf16[4,30], index: 5, kind: input, shape index: {}]
  %s6 = inlined_call_operand.vmem [shape: f32[4,1], index: 6, kind: input, shape index: {}]
  %s7 = inlined_call_operand.hbm [shape: f32[4,128], index: 7, kind: output, shape index: {}]
  %s8 = sld [smem:[#allocation0]]
  $region38: #{tpu_custom_call.1} parent=0
    _
  %s10 = ssub.s32 1, %s8
  %s11 = scalar_select 0, %s10, %s8
  $region1: #{tpu_custom_call.1} parent=0
    #allocation2 [shape = 'u8[2048]{0}', space=vmem, size = 0x800, scoped, tag = 'output window, operand 0, single buffered']
    #allocation3 [shape = 's32[1]{0}', space=sflag, size = 0x4, scoped, tag = 'scoped memory for tpu_custom_call.1']
    %12 = vsyncpa [#allocation3], 0
    // Predicated region
    $region2: #{tpu_custom_call.1} parent=1 // pred_check
      _
    $region3: #{tpu_custom_call.1} parent=1 // pred_check_branch
      %14 = sbr.rel (0) target = $region5
    $region4: #{tpu_custom_call.1} parent=1 // pred_region
      _
    $region5: #{tpu_custom_call.1} parent=1 // pred_fallthru
      _
    // Predicated region
    $region6: #{tpu_custom_call.1} parent=1 // pred_check
      _
    $region7: #{tpu_custom_call.1} parent=1 // pred_check_branch
      %16 = sbr.rel (0) target = $region9
    $region8: #{tpu_custom_call.1} parent=1 // pred_region
      _
    $region9: #{tpu_custom_call.1} parent=1 // pred_fallthru
      _
    // Predicated region
    $region10: #{tpu_custom_call.1} parent=1 // pred_check
      _
    $region11: #{tpu_custom_call.1} parent=1 // pred_check_branch
      %18 = sbr.rel (0) target = $region13
    $region12: #{tpu_custom_call.1} parent=1 // pred_region
      _
    $region13: #{tpu_custom_call.1} parent=1 // pred_fallthru
      _
    // Predicated region
    $region14: #{tpu_custom_call.1} parent=1 // pred_check
      _
    $region15: #{tpu_custom_call.1} parent=1 // pred_check_branch
      %20 = sbr.rel (0) target = $region17
    $region16: #{tpu_custom_call.1} parent=1 // pred_region
      _
    $region17: #{tpu_custom_call.1} parent=1 // pred_fallthru
      _
    // Predicated region
    $region18: #{tpu_custom_call.1} parent=1 // pred_check
      _
    $region19: #{tpu_custom_call.1} parent=1 // pred_check_branch
      %22 = sbr.rel (0) target = $region21
    $region20: #{tpu_custom_call.1} parent=1 // pred_region
      _
    $region21: #{tpu_custom_call.1} parent=1 // pred_fallthru
      _
    // Predicated region
    $region22: #{tpu_custom_call.1} parent=1 // pred_check
      _
    $region23: #{tpu_custom_call.1} parent=1 // pred_check_branch
      %24 = sbr.rel (0) target = $region25
    $region24: #{tpu_custom_call.1} parent=1 // pred_region
      _
    $region25: #{tpu_custom_call.1} parent=1 // pred_fallthru
      _
    // Predicated region
    $region26: #{tpu_custom_call.1} parent=1 // pred_check
      _
    $region27: #{tpu_custom_call.1} parent=1 // pred_check_branch
      %26 = sbr.rel (0) target = $region29
    $region28: #{tpu_custom_call.1} parent=1 // pred_region
      _
    $region29: #{tpu_custom_call.1} parent=1 // pred_fallthru
      _
    %v28 = vld [vmem:[%s0] sm:$0xf]
    %v29 = vld [vmem:[%s0 + $0x4] sm:$0xf]
    %v30 = vld [vmem:[%s1] sm:$0xf]
    %v31 = vld [vmem:[%s1 + $0x4] sm:$0xf]
    %v32 = vld [vmem:[%s1 + $0x8] sm:$0xf]
    %v33 = vld [vmem:[%s1 + $0xc] sm:$0x7]
    %v34 = vld [vmem:[%s2] sm:$0xff]
    %v35 = vld [vmem:[%s2 + $0x8] sm:$0xff]
    %v36 = vld [vmem:[%s2 + $0x10] sm:$0xff]
    %v37 = vld [vmem:[%s2 + $0x18] sm:$0x3f]
    %39 = vset.pattern.permute.xlu0 0
    %40 = vperm.xlu0 %39, %v34
    %v41 = vpop.permute.xlu0 %40
    %44 = vset.pattern.permute.xlu0 0
    %45 = vperm.xlu0 %44, %v35
    %v46 = vpop.permute.xlu0 %45
    %49 = vset.pattern.permute.xlu0 0
    %50 = vperm.xlu0 %49, %v36
    %v51 = vpop.permute.xlu0 %50
    %54 = vset.pattern.permute.xlu0 0
    %55 = vperm.xlu0 %54, %v37
    %v56 = vpop.permute.xlu0 %55
    %v62 = vunpack.c.l.b16 %v30
    %v63 = vunpack.c.l.b16 %v31
    %v64 = vunpack.c.l.b16 %v32
    %v65 = vunpack.c.l.b16 %v33
    %v66 = vpack.c.b16 %v63, %v62
    %v67 = vpack.c.b16 %v65, %v64
    %v70 = vunpack.c.l.b16 %v28
    %v71 = vunpack.c.l.b16 %v29
    %v72 = vpack.c.b16 %v71, %v70
    %vm74 = vcmask 130048
    %v76 = vsel %vm74, %v66, 0
    %v79 = vsel %vm74, %v67, 0
    %81 = vmatprep.subr.bf16.mxu0 0
    %82 = vmatpush1.bf16.msra.mxu0 %v72
    %83 = vmatprep.subr.bf16.mxu0 0
    %84 = vmatpush1.bf16.msra.mxu0 0
    %85 = vmatprep.subr.bf16.mxu0 0
    %86 = vmatpush1.bf16.msra.mxu0 0
    %87 = vmatprep.subr.bf16.mxu0 0
    %88 = vmatpush1.bf16.msra.mxu0 0
    %89 = vmatprep.subr.bf16.mxu0 0
    %90 = vmatpush1.bf16.msra.mxu0 0
    %91 = vmatprep.subr.bf16.mxu0 0
    %92 = vmatpush1.bf16.msra.mxu0 0
    %93 = vmatprep.subr.bf16.mxu0 0
    %94 = vmatpush1.bf16.msra.mxu0 0
    %95 = vmatprep.subr.bf16.mxu0 0
    %96 = vmatpush1.bf16.msra.mxu0 0
    %97 = vmatprep.subr.bf16.mxu0 0
    %98 = vmatpush1.bf16.msra.mxu0 0
    %99 = vmatprep.subr.bf16.mxu0 0
    %100 = vmatpush1.bf16.msra.mxu0 0
    %101 = vmatprep.subr.bf16.mxu0 0
    %102 = vmatpush1.bf16.msra.mxu0 0
    %103 = vmatprep.subr.bf16.mxu0 0
    %104 = vmatpush1.bf16.msra.mxu0 0
    %105 = vmatprep.subr.bf16.mxu0 0
    %106 = vmatpush1.bf16.msra.mxu0 0
    %107 = vmatprep.subr.bf16.mxu0 0
    %108 = vmatpush1.bf16.msra.mxu0 0
    %109 = vmatprep.subr.bf16.mxu0 0
    %110 = vmatpush1.bf16.msra.mxu0 0
    %111 = vmatprep.subr.bf16.mxu0 0
    %112 = vmatpush1.bf16.msra.mxu0 0
    %113 = vmatprep.mubr.bf16.mxu0 0
    %114 = vmatmul.mubr.bf16.gmra.mrb[0].mxu0 %v76
    %v115 = vpop.f32.mrb[0].mxu0
    %v116 = vadd.f32 %v41, %v115
    %v117 = vpop.f32.mrb[0].mxu0
    %v118 = vpop.f32.mrb[0].mxu0
    %v119 = vadd.f32 %v46, %v118
    %v120 = vpop.f32.mrb[0].mxu0
    %121 = vmatprep.mubr.bf16.mxu0 0
    %122 = vmatmul.mubr.bf16.gmra.mrb[0].mxu0 %v79
    %v123 = vpop.f32.mrb[0].mxu0
    %v124 = vadd.f32 %v51, %v123
    %v125 = vpop.f32.mrb[0].mxu0
    %v126 = vpop.f32.mrb[0].mxu0
    %v127 = vadd.f32 %v56, %v126
    %v128 = vpop.f32.mrb[0].mxu0
    %129 = vdwg.mxu0
    %v130 = vtanh.pop %v116
    %v131 = vtanh.pop %v119
    %v132 = vtanh.pop %v124
    %v133 = vtanh.pop %v127
    %v134 = vld [vmem:[%s3] sm:$0xf]
    %v135 = vld [vmem:[%s3 + $0x4] sm:$0xf]
    %v136 = vld [vmem:[%s3 + $0x8] sm:$0xf]
    %v137 = vld [vmem:[%s3 + $0xc] sm:$0x7]
    %v138 = vpack.c.bf16 %v131, %v130
    %v139 = vpack.c.bf16 %v133, %v132
    %v140 = vld [vmem:[%s4] sm:$0xff]
    %v141 = vld [vmem:[%s4 + $0x8] sm:$0xff]
    %v142 = vld [vmem:[%s4 + $0x10] sm:$0xff]
    %v143 = vld [vmem:[%s4 + $0x18] sm:$0x3f]
    %145 = vset.pattern.permute.xlu0 0
    %146 = vperm.xlu0 %145, %v140
    %v147 = vpop.permute.xlu0 %146
    %150 = vset.pattern.permute.xlu0 0
    %151 = vperm.xlu0 %150, %v141
    %v152 = vpop.permute.xlu0 %151
    %155 = vset.pattern.permute.xlu0 0
    %156 = vperm.xlu0 %155, %v142
    %v157 = vpop.permute.xlu0 %156
    %160 = vset.pattern.permute.xlu0 0
    %161 = vperm.xlu0 %160, %v143
    %v162 = vpop.permute.xlu0 %161
    %v168 = vunpack.c.l.b16 %v134
    %v169 = vunpack.c.l.b16 %v135
    %v170 = vunpack.c.l.b16 %v136
    %v171 = vunpack.c.l.b16 %v137
    %v172 = vpack.c.b16 %v169, %v168
    %v173 = vpack.c.b16 %v171, %v170
    %vm174 = vcmask 244736
    %v176 = vsel %vm174, %v172, 0
    %v179 = vsel %vm174, %v173, 0
    %vm181 = vcmask 1046528
    %v183 = vsel %vm181, %v139, 0
    %185 = vmatprep.subr.bf16.mxu0 0
    %186 = vmatpush1.bf16.msra.mxu0 %v138
    %187 = vmatprep.subr.bf16.mxu0 0
    %188 = vmatpush1.bf16.msra.mxu0 %v183
    %189 = vmatprep.subr.bf16.mxu0 0
    %190 = vmatpush1.bf16.msra.mxu0 0
    %191 = vmatprep.subr.bf16.mxu0 0
    %192 = vmatpush1.bf16.msra.mxu0 0
    %193 = vmatprep.subr.bf16.mxu0 0
    %194 = vmatpush1.bf16.msra.mxu0 0
    %195 = vmatprep.subr.bf16.mxu0 0
    %196 = vmatpush1.bf16.msra.mxu0 0
    %197 = vmatprep.subr.bf16.mxu0 0
    %198 = vmatpush1.bf16.msra.mxu0 0
    %199 = vmatprep.subr.bf16.mxu0 0
    %200 = vmatpush1.bf16.msra.mxu0 0
    %201 = vmatprep.subr.bf16.mxu0 0
    %202 = vmatpush1.bf16.msra.mxu0 0
    %203 = vmatprep.subr.bf16.mxu0 0
    %204 = vmatpush1.bf16.msra.mxu0 0
    %205 = vmatprep.subr.bf16.mxu0 0
    %206 = vmatpush1.bf16.msra.mxu0 0
    %207 = vmatprep.subr.bf16.mxu0 0
    %208 = vmatpush1.bf16.msra.mxu0 0
    %209 = vmatprep.subr.bf16.mxu0 0
    %210 = vmatpush1.bf16.msra.mxu0 0
    %211 = vmatprep.subr.bf16.mxu0 0
    %212 = vmatpush1.bf16.msra.mxu0 0
    %213 = vmatprep.subr.bf16.mxu0 0
    %214 = vmatpush1.bf16.msra.mxu0 0
    %215 = vmatprep.subr.bf16.mxu0 0
    %216 = vmatpush1.bf16.msra.mxu0 0
    %217 = vmatprep.mubr.bf16.mxu0 0
    %218 = vmatmul.mubr.bf16.gmra.mrb[0].mxu0 %v176
    %v219 = vpop.f32.mrb[0].mxu0
    %v220 = vadd.f32 %v147, %v219
    %v221 = vpop.f32.mrb[0].mxu0
    %v222 = vpop.f32.mrb[0].mxu0
    %v223 = vadd.f32 %v152, %v222
    %v224 = vpop.f32.mrb[0].mxu0
    %225 = vmatprep.mubr.bf16.mxu0 0
    %226 = vmatmul.mubr.bf16.gmra.mrb[0].mxu0 %v179
    %v227 = vpop.f32.mrb[0].mxu0
    %v228 = vadd.f32 %v157, %v227
    %v229 = vpop.f32.mrb[0].mxu0
    %v230 = vpop.f32.mrb[0].mxu0
    %v231 = vadd.f32 %v162, %v230
    %v232 = vpop.f32.mrb[0].mxu0
    %233 = vdwg.mxu0
    %v234 = vtanh.pop %v220
    %v235 = vtanh.pop %v223
    %v236 = vtanh.pop %v228
    %v237 = vtanh.pop %v231
    %v238 = vld [vmem:[%s5] sm:$0x3]
    %v239 = vpack.c.bf16 %v235, %v234
    %v240 = vpack.c.bf16 %v237, %v236
    %v241 = vld [vmem:[%s6] sm:$0xf]
    %243 = vset.pattern.permute.xlu0 0
    %244 = vperm.xlu0 %243, %v241
    %v245 = vpop.permute.xlu0 %244
    %v248 = vsel %vm174, %v238, 0
    %v251 = vsel %vm181, %v240, 0
    %253 = vmatprep.subr.bf16.mxu0 0
    %254 = vmatpush1.bf16.msra.mxu0 %v239
    %255 = vmatprep.subr.bf16.mxu0 0
    %256 = vmatpush1.bf16.msra.mxu0 %v251
    %257 = vmatprep.subr.bf16.mxu0 0
    %258 = vmatpush1.bf16.msra.mxu0 0
    %259 = vmatprep.subr.bf16.mxu0 0
    %260 = vmatpush1.bf16.msra.mxu0 0
    %261 = vmatprep.subr.bf16.mxu0 0
    %262 = vmatpush1.bf16.msra.mxu0 0
    %263 = vmatprep.subr.bf16.mxu0 0
    %264 = vmatpush1.bf16.msra.mxu0 0
    %265 = vmatprep.subr.bf16.mxu0 0
    %266 = vmatpush1.bf16.msra.mxu0 0
    %267 = vmatprep.subr.bf16.mxu0 0
    %268 = vmatpush1.bf16.msra.mxu0 0
    %269 = vmatprep.subr.bf16.mxu0 0
    %270 = vmatpush1.bf16.msra.mxu0 0
    %271 = vmatprep.subr.bf16.mxu0 0
    %272 = vmatpush1.bf16.msra.mxu0 0
    %273 = vmatprep.subr.bf16.mxu0 0
    %274 = vmatpush1.bf16.msra.mxu0 0
    %275 = vmatprep.subr.bf16.mxu0 0
    %276 = vmatpush1.bf16.msra.mxu0 0
    %277 = vmatprep.subr.bf16.mxu0 0
    %278 = vmatpush1.bf16.msra.mxu0 0
    %279 = vmatprep.subr.bf16.mxu0 0
    %280 = vmatpush1.bf16.msra.mxu0 0
    %281 = vmatprep.subr.bf16.mxu0 0
    %282 = vmatpush1.bf16.msra.mxu0 0
    %283 = vmatprep.subr.bf16.mxu0 0
    %284 = vmatpush1.bf16.msra.mxu0 0
    %285 = vmatprep.mubr.bf16.mxu0 0
    %286 = vmatmul.mubr.bf16.gmra.mrb[0].mxu0 %v248
    %v287 = vpop.f32.mrb[0].mxu0
    %v288 = vadd.f32 %v245, %v287
    %v289 = vpop.f32.mrb[0].mxu0
    %v290 = vpop.f32.mrb[0].mxu0
    %v291 = vpop.f32.mrb[0].mxu0
    %292 = vdwg.mxu0
    %v293 = vtanh.pop %v288
    %294 = vst [vmem:[#allocation2] sm:$0xf] %v293
    // Predicated region
    $region30: #{tpu_custom_call.1} parent=1 // pred_check
      _
    $region31: #{tpu_custom_call.1} parent=1 // pred_check_branch
      %296 = sbr.rel (0) target = $region33
    $region32: #{tpu_custom_call.1} parent=1 // pred_region
      %s298 = ssub.s32 64, 64
      %299 = vsyncadd [#allocation3], %s298
      %s301 = sshll.u32 [#allocation2], 4
      %s302 = int_to_ptr.vmem [resolvable:$true] %s301
      %304 = dma.vmem_to_hbm [thread:$0]  %s302, 64, %s7, [#allocation3]
    $region33: #{tpu_custom_call.1} parent=1 // pred_fallthru
      _
    // Predicated region
    $region34: #{tpu_custom_call.1} parent=1 // pred_check
      _
    $region35: #{tpu_custom_call.1} parent=1 // pred_check_branch
      %306 = sbr.rel (0) target = $region37
    $region36: #{tpu_custom_call.1} parent=1 // pred_region
      %307 = dma.done [#allocation3], 64
    $region37: #{tpu_custom_call.1} parent=1 // pred_fallthru
      _
    %308 = vsyncpa [#allocation3], 1

</llo_original>
